<compile_context>
chip_gen: v5e
topology: v5e:2x2
jax: 0.10.0
libtpu: 0.0.40
codegen_flags: <defaults>
</compile_context>

<pallas_src>
import functools

import jax
import jax.numpy as jnp
from jax.experimental import pallas as pl
from jax.experimental.pallas import tpu as pltpu


def _label_smoothing_kernel(pred_ref, tgt_ref, out_ref, *, classes, smoothing,
                            n_rows, tile_n):
    # Upcast to f32 in-kernel (bf16 inputs accepted at the call boundary; v5e
    # VPU/EUP have no bf16, so all math stays in f32).
    x = pred_ref[...].astype(jnp.float32)                           # (tn, C)

    # Max-stabilized log-sum-exp along the class (lane) axis.
    m = jnp.max(x, axis=-1, keepdims=True)                          # (tn, 1)
    se = jnp.sum(jnp.exp(x - m), axis=-1, keepdims=True)            # (tn, 1)
    lse = jnp.log(se) + m                                           # (tn, 1)

    # Folded label-smoothing loss.  Because sum_c(true_dist) == 1:
    #   sum_c(-true_dist * (x - lse)) = lse - sum_c(true_dist * x)
    # with true_dist = smooth_val + (confidence - smooth_val) * onehot.
    smooth_val = smoothing / (classes - 1)
    confidence = 1.0 - smoothing

    tgt = tgt_ref[...]                                              # (tn, 1) i32
    col = jax.lax.broadcasted_iota(jnp.int32, (1, classes), 1)      # (1, C)
    w = jnp.where(col == tgt, confidence, smooth_val)               # (tn, C)
    wsum = jnp.sum(w * x, axis=-1, keepdims=True)                   # (tn, 1)
    row_loss = lse - wsum                                           # (tn, 1)

    # Mask ragged-tail / OOB rows of the last (partial) tile, then reduce the
    # tile to a single partial sum (sublane reduce, keepdims -> (1, 1)).
    row = jax.lax.broadcasted_iota(jnp.int32, (tile_n, 1), 0)       # (tn, 1)
    valid = (pl.program_id(0) * tile_n + row) < n_rows
    masked = jnp.where(valid, row_loss, 0.0)                        # (tn, 1)
    partial = jnp.sum(masked, axis=0, keepdims=True)                # (1, 1)

    # Lane-dense, tile-aligned broadcast store: full (8, 128) unmasked vst.
    out_ref[...] = jnp.broadcast_to(partial, (8, 128))


def _round_up(x, m):
    return ((x + m - 1) // m) * m


def label_smoothing_loss(pred, target, *, classes, smoothing=0.2, tile_n=None):
    """pred: (N, C) float (f32 or bf16), target: (N,) int. Returns () float32."""
    N, C = pred.shape
    assert C == classes
    in_bytes = jnp.dtype(pred.dtype).itemsize

    # Generation-aware VMEM budget: v5e/v6e have 128 MiB physical VMEM
    # (raise scoped limit to 64 MiB, ~8 MiB f32 tile); v7x has only 64 MiB per
    # TensorCore (keep 32 MiB limit, ~4 MiB tile).
    try:
        vmem_cap = pltpu.get_tpu_info().vmem_capacity_bytes
    except Exception:  # be conservative if the query is unavailable
        vmem_cap = 64 * 1024 * 1024
    if vmem_cap >= 100 * 1024 * 1024:       # v5e / v6e
        tile_budget = 8 * 1024 * 1024
        vmem_limit = 64 * 1024 * 1024
    else:                                   # v7x (64 MiB / TC)
        tile_budget = 4 * 1024 * 1024
        vmem_limit = 32 * 1024 * 1024

    if tile_n is None:
        # Largest row tile whose f32 working tile stays within the budget;
        # double-buffered input + f32 temporaries + the small padded target
        # buffers then fit comfortably under vmem_limit on every generation.
        rows_budget = max(8, tile_budget // (C * 4))
        tile_n = max(8, min(2048, (rows_budget // 8) * 8))
    # Never use a tile larger than the (8-rounded) batch.
    tile_n = min(tile_n, _round_up(N, 8))
    # Keep at least 2 grid steps when possible so both v7x TensorCores get
    # work via the "parallel" grid axis (negligible cost on 1-TC chips).
    tile_n = min(tile_n, max(8, _round_up(pl.cdiv(N, 2), 8)))
    tile_n = max(8, (tile_n // 8) * 8)

    n_tiles = pl.cdiv(N, tile_n)

    # Targets as an (N, 1) i32 column; no padding needed — the last (partial)
    # block's OOB rows are masked in-kernel.
    tgt2d = target.astype(jnp.int32).reshape(N, 1)

    kernel = functools.partial(
        _label_smoothing_kernel, classes=classes, smoothing=float(smoothing),
        n_rows=N, tile_n=tile_n)

    cost = pl.CostEstimate(
        flops=8 * N * C,
        transcendentals=N * C,
        bytes_accessed=N * C * in_bytes + N * 4 + n_tiles * 8 * 128 * 4)

    out = pl.pallas_call(
        kernel,
        out_shape=jax.ShapeDtypeStruct((n_tiles * 8, 128), jnp.float32),
        grid_spec=pltpu.PrefetchScalarGridSpec(
            num_scalar_prefetch=0,
            grid=(n_tiles,),
            in_specs=[
                pl.BlockSpec((tile_n, C), lambda i: (i, 0)),
                pl.BlockSpec((tile_n, 1), lambda i: (i, 0)),
            ],
            out_specs=pl.BlockSpec((8, 128), lambda i: (i, 0)),
        ),
        compiler_params=pltpu.CompilerParams(
            dimension_semantics=("parallel",),
            vmem_limit_bytes=vmem_limit),
        cost_estimate=cost,
    )(pred, tgt2d)

    # Each tile broadcast its partial sum across its (8, 128) output block;
    # pick one element per block, sum, and take the batch mean in plain JAX.
    partials = out[::8, 0]                                          # (n_tiles,)
    return jnp.sum(partials) / N


def _reference(pred, target, *, classes, smoothing=0.2):
    logp = jax.nn.log_softmax(pred.astype(jnp.float32), axis=-1)
    confidence = 1.0 - smoothing
    true_dist = jnp.full_like(logp, smoothing / (classes - 1))
    true_dist = true_dist.at[jnp.arange(pred.shape[0]), target].set(confidence)
    return jnp.mean(jnp.sum(-true_dist * logp, axis=-1))


if __name__ == "__main__":
    smoothing = 0.2
    key = jax.random.PRNGKey(0)

    # (N, C, dtype): aligned f32, ragged f32 (exercises the no-pad partial last
    # block + in-kernel tail masking), and a bf16 case (in-kernel upcast).
    cases = [
        (16, 128, jnp.float32),
        (13, 128, jnp.float32),
        (24, 160, jnp.bfloat16),
    ]
    for N, C, dt in cases:
        key, k1, k2 = jax.random.split(key, 3)
        pred = jax.random.normal(k1, (N, C), dtype=jnp.float32).astype(dt)
        target = jax.random.randint(k2, (N,), 0, C, dtype=jnp.int32)

        loss = label_smoothing_loss(pred, target, classes=C, smoothing=smoothing)
        loss = jax.block_until_ready(loss)

        ref = _reference(pred, target, classes=C, smoothing=smoothing)
        tol = 1e-5 if dt == jnp.float32 else 1e-3
        assert jnp.allclose(loss, ref, atol=tol, rtol=tol), (N, C, dt, loss, ref)

    print("KERNEL_OK")
</pallas_src>

<mosaic_0001>
module attributes {stable_mosaic.version = 11 : i64} {
  func.func @_label_smoothing_kernel(%arg0: i32, %arg1: memref<8x128xf32, #tpu.memory_space<vmem>>, %arg2: memref<8x1xi32, #tpu.memory_space<vmem>>, %arg3: memref<8x128xf32, #tpu.memory_space<vmem>>) attributes {dimension_semantics = [#tpu.dimension_semantics<parallel>], iteration_bounds = array<i64: 2>, scalar_prefetch = 0 : i64, scratch_operands = 0 : i64, tpu.core_type = #tpu.core_type<tc>, window_params = [{transform_indices = @transform_0, window_bounds = array<i64: 8, 128>}, {transform_indices = @transform_1, window_bounds = array<i64: 8, 1>}, {transform_indices = @transform_2, window_bounds = array<i64: 8, 128>}]} {
    %c0 = arith.constant 0 : index
    %c0_0 = arith.constant 0 : index
    %0 = vector.load %arg1[%c0, %c0_0] : memref<8x128xf32, #tpu.memory_space<vmem>>, vector<8x128xf32>
    %cst = arith.constant dense<0xFF800000> : vector<8xf32>
    %1 = vector.multi_reduction <maximumf>, %0, %cst [1] : vector<8x128xf32> to vector<8xf32>
    %2 = vector.shape_cast %1 : vector<8xf32> to vector<8x1xf32>
    %3 = vector.broadcast %2 : vector<8x1xf32> to vector<8x128xf32>
    %4 = arith.subf %0, %3 : vector<8x128xf32>
    %5 = math.exp %4 : vector<8x128xf32>
    %cst_1 = arith.constant dense<0.000000e+00> : vector<8xf32>
    %6 = vector.multi_reduction <add>, %5, %cst_1 [1] : vector<8x128xf32> to vector<8xf32>
    %7 = vector.shape_cast %6 : vector<8xf32> to vector<8x1xf32>
    %8 = math.log %7 : vector<8x1xf32>
    %9 = arith.addf %8, %2 : vector<8x1xf32>
    %c0_2 = arith.constant 0 : index
    %c0_3 = arith.constant 0 : index
    %10 = vector.load %arg2[%c0_2, %c0_3] : memref<8x1xi32, #tpu.memory_space<vmem>>, vector<8x1xi32>
    %11 = tpu.iota {dimensions = array<i32: 1>} : vector<1x128xi32>
    %12 = vector.broadcast %11 : vector<1x128xi32> to vector<8x128xi32>
    %13 = vector.broadcast %10 : vector<8x1xi32> to vector<8x128xi32>
    %14 = arith.cmpi eq, %12, %13 : vector<8x128xi32>
    %cst_4 = arith.constant 8.000000e-01 : f32
    %cst_5 = arith.constant 0.00157480314 : f32
    %15 = vector.broadcast %cst_4 : f32 to vector<8x128xf32>
    %16 = vector.broadcast %cst_5 : f32 to vector<8x128xf32>
    %17 = arith.select %14, %15, %16 : vector<8x128xi1>, vector<8x128xf32>
    %18 = arith.mulf %17, %0 : vector<8x128xf32>
    %cst_6 = arith.constant dense<0.000000e+00> : vector<8xf32>
    %19 = vector.multi_reduction <add>, %18, %cst_6 [1] : vector<8x128xf32> to vector<8xf32>
    %20 = vector.shape_cast %19 : vector<8xf32> to vector<8x1xf32>
    %21 = arith.subf %9, %20 : vector<8x1xf32>
    %22 = tpu.iota {dimensions = array<i32: 0>} : vector<8x1xi32>
    %c8_i32 = arith.constant 8 : i32
    %23 = arith.muli %arg0, %c8_i32 : i32
    %24 = vector.broadcast %23 : i32 to vector<8x1xi32>
    %25 = arith.addi %24, %22 : vector<8x1xi32>
    %c16_i32 = arith.constant 16 : i32
    %26 = vector.broadcast %c16_i32 : i32 to vector<8x1xi32>
    %27 = arith.cmpi slt, %25, %26 : vector<8x1xi32>
    %cst_7 = arith.constant 0.000000e+00 : f32
    %28 = vector.broadcast %cst_7 : f32 to vector<8x1xf32>
    %29 = arith.select %27, %21, %28 : vector<8x1xi1>, vector<8x1xf32>
    %cst_8 = arith.constant dense<0.000000e+00> : vector<1xf32>
    %30 = vector.multi_reduction <add>, %29, %cst_8 [0] : vector<8x1xf32> to vector<1xf32>
    %31 = vector.shape_cast %30 : vector<1xf32> to vector<1x1xf32>
    %32 = vector.shape_cast %31 : vector<1x1xf32> to vector<1x1xf32>
    %33 = vector.broadcast %32 : vector<1x1xf32> to vector<8x128xf32>
    %c0_9 = arith.constant 0 : index
    %c0_10 = arith.constant 0 : index
    %34 = vector.load %arg3[%c0_9, %c0_10] : memref<8x128xf32, #tpu.memory_space<vmem>>, vector<8x128xf32>
    tpu.vector_store %arg3[%c0_9, %c0_10], %33 {strides = array<i32>} : memref<8x128xf32, #tpu.memory_space<vmem>>, vector<8x128xf32>,
    return
  }
  func.func @transform_0(%arg0: i32) -> (i32, i32) {
    %c0_i32 = arith.constant 0 : i32
    %c0_i32_0 = arith.constant 0 : i32
    return %arg0, %c0_i32 : i32, i32
  }
  func.func @transform_1(%arg0: i32) -> (i32, i32) {
    %c0_i32 = arith.constant 0 : i32
    %c0_i32_0 = arith.constant 0 : i32
    return %arg0, %c0_i32 : i32, i32
  }
  func.func @transform_2(%arg0: i32) -> (i32, i32) {
    %c0_i32 = arith.constant 0 : i32
    %c0_i32_0 = arith.constant 0 : i32
    return %arg0, %c0_i32 : i32, i32
  }
}

</mosaic_0001>

<llo_original>
// kernel: tpu_custom_call.1
$region0: #{tpu_custom_call.1}
  #allocation0 [shape = 'u32[]', space=smem, size = 0x4, offset = 0x4, fixed_abs, tag = 'smem constant byte address 0x4 - core index']
  #allocation1 [shape = 'u32[72,128]{1,0:T(1,128)}', space=vmem, size = 0x9000, scoped, tag = 'internal scratch']
  %s0 = inlined_call_operand.vmem [shape: f32[16,128], index: 0, kind: input, shape index: {}]
  %s1 = inlined_call_operand.vmem [shape: s32[16,1], index: 1, kind: input, shape index: {}]
  %s2 = inlined_call_operand.hbm [shape: f32[16,128], index: 2, kind: output, shape index: {}]
  %s3 = sld [smem:[#allocation0]]
  $region41: #{tpu_custom_call.1} parent=0
    _
  %s5 = ssub.s32 1, %s3
  %s6 = scalar_select 0, %s5, %s3
  $region1: #{tpu_custom_call.1} parent=0
    #allocation2 [shape = 'u8[8192]{0}', space=vmem, size = 0x2000, scoped, tag = 'output window, operand 0']
    #allocation3 [shape = 's32[2]{0}', space=sflag, size = 0x8, scoped, tag = 'scoped memory for tpu_custom_call.1']
    %7 = vsyncpa [#allocation3], 0
    %s8 = scalar_lea.sflag [#allocation3], 1
    %9 = vsyncpa %s8, 0
    loop: start=0, step=1, limit=4
    $region2: #{tpu_custom_call.1} parent=1 // loop_pre_header
      _
    $region3: #{tpu_custom_call.1} parent=1 // loop_header
      %s11 = sphi 0, %s15
      %p12 = scmp.ge.s32.totalorder %s11, 4
      %s21 = sphi 0, %s23
      %s24 = sphi 0, %s21
      %s25 = sphi 0, %s24
      %s41 = sphi 0, %s25
      %s47 = sphi 0, %s49
      %s50 = sphi 0, %s47
      %s51 = sphi 0, %s50
      %s67 = sphi 0, %s51
      %s73 = sphi 0, %s75
      %s76 = sphi 0, %s73
      %s77 = sphi 0, %s76
      %s93 = sphi 0, %s77
    $region4: #{tpu_custom_call.1} parent=1 // loop_header_branch
      %14 = sbr.rel (%p12) target = $region8
    $region5: #{tpu_custom_call.1} parent=1 // loop_body
      %s16 = ssub.s32 %s11, 1
      %s17 = ssub.s32 %s11, 2
      %s18 = sadd.s32 %s11, 1
      %s19 = ssub.s32 %s11, %s18
      %p20 = scmp.eq.s32.totalorder %s19, 0
      %s22 = sadd.s32 %s21, 1
      %s23 = scalar_select %p20, %s21, %s22
      %p26 = pneg %p20
      %p27 = scmp.eq.s32.totalorder %s11, 1
      %p28 = por %p26, %p27
      %p29 = scmp.ne.s32.totalorder %s21, %s24
      %p30 = scmp.eq.s32.totalorder %s11, 0
      %p31 = por %p29, %p30
      %p32 = scmp.ne.s32.totalorder %s21, %s24
      %p33 = scmp.eq.s32.totalorder %s16, 1
      %p34 = por %p32, %p33
      %p35 = scmp.ne.s32.totalorder %s24, %s25
      %p36 = scmp.eq.s32.totalorder %s16, 0
      %p37 = por %p35, %p36
      %p38 = scmp.ne.s32.totalorder %s24, %s25
      %p39 = scmp.eq.s32.totalorder %s17, 1
      %p40 = por %p38, %p39
      %p42 = scmp.ne.s32.totalorder %s25, %s41
      %p43 = scmp.eq.s32.totalorder %s17, 0
      %p44 = por %p42, %p43
      %s45 = ssub.s32 %s11, %s18
      %p46 = scmp.eq.s32.totalorder %s45, 0
      %s48 = sadd.s32 %s47, 1
      %s49 = scalar_select %p46, %s47, %s48
      %p52 = pneg %p46
      %p53 = scmp.eq.s32.totalorder %s11, 1
      %p54 = por %p52, %p53
      %p55 = scmp.ne.s32.totalorder %s47, %s50
      %p56 = scmp.eq.s32.totalorder %s11, 0
      %p57 = por %p55, %p56
      %p58 = scmp.ne.s32.totalorder %s47, %s50
      %p59 = scmp.eq.s32.totalorder %s16, 1
      %p60 = por %p58, %p59
      %p61 = scmp.ne.s32.totalorder %s50, %s51
      %p62 = scmp.eq.s32.totalorder %s16, 0
      %p63 = por %p61, %p62
      %p64 = scmp.ne.s32.totalorder %s50, %s51
      %p65 = scmp.eq.s32.totalorder %s17, 1
      %p66 = por %p64, %p65
      %p68 = scmp.ne.s32.totalorder %s51, %s67
      %p69 = scmp.eq.s32.totalorder %s17, 0
      %p70 = por %p68, %p69
      %s71 = ssub.s32 %s11, %s18
      %p72 = scmp.eq.s32.totalorder %s71, 0
      %s74 = sadd.s32 %s73, 1
      %s75 = scalar_select %p72, %s73, %s74
      %p78 = pneg %p72
      %p79 = scmp.eq.s32.totalorder %s11, 1
      %p80 = por %p78, %p79
      %p81 = scmp.ne.s32.totalorder %s73, %s76
      %p82 = scmp.eq.s32.totalorder %s11, 0
      %p83 = por %p81, %p82
      %p84 = scmp.ne.s32.totalorder %s73, %s76
      %p85 = scmp.eq.s32.totalorder %s16, 1
      %p86 = por %p84, %p85
      %p87 = scmp.ne.s32.totalorder %s76, %s77
      %p88 = scmp.eq.s32.totalorder %s16, 0
      %p89 = por %p87, %p88
      %p90 = scmp.ne.s32.totalorder %s76, %s77
      %p91 = scmp.eq.s32.totalorder %s17, 1
      %p92 = por %p90, %p91
      %p94 = scmp.ne.s32.totalorder %s77, %s93
      %p95 = scmp.eq.s32.totalorder %s17, 0
      %p96 = por %p94, %p95
      %p97 = scmp.le.s32.totalorder 1, %s11
      %p98 = scmp.lt.s32.totalorder %s11, 3
      %p99 = pnand %p97, %p98
      %p100 = pneg %p99
      // Predicated region
      $region9: #{tpu_custom_call.1} parent=5 // pred_check
        _
      $region10: #{tpu_custom_call.1} parent=5 // pred_check_branch
        %102 = sbr.rel (%p99) target = $region12
      $region11: #{tpu_custom_call.1} parent=5 // pred_region
        %s103 = ssub.s32 %s11, 1
      $region12: #{tpu_custom_call.1} parent=5 // pred_fallthru
        _
      %p104 = scmp.lt.s32.totalorder %s11, 2
      // Predicated region
      $region13: #{tpu_custom_call.1} parent=5 // pred_check
        %p105 = pneg %p104
      $region14: #{tpu_custom_call.1} parent=5 // pred_check_branch
        %107 = sbr.rel (%p105) target = $region16
      $region15: #{tpu_custom_call.1} parent=5 // pred_region
        // Predicated region
        $region17: #{tpu_custom_call.1} parent=15 // pred_check
          %p108 = pneg %p31
        $region18: #{tpu_custom_call.1} parent=15 // pred_check_branch
          %110 = sbr.rel (%p108) target = $region20
        $region19: #{tpu_custom_call.1} parent=15 // pred_region
          %p111 = scmp.lt.s32.totalorder %s11, 1
          %s112 = scalar_select %p111, %s11, 1
          %s113 = smul.addr %s112, 8
          %s114 = scalar_lea.vmem %s0, %s113
        $region20: #{tpu_custom_call.1} parent=15 // pred_fallthru
          _
        // Predicated region
        $region21: #{tpu_custom_call.1} parent=15 // pred_check
          %p115 = pneg %p57
        $region22: #{tpu_custom_call.1} parent=15 // pred_check_branch
          %117 = sbr.rel (%p115) target = $region24
        $region23: #{tpu_custom_call.1} parent=15 // pred_region
          %p118 = scmp.lt.s32.totalorder %s11, 1
          %s119 = scalar_select %p118, %s11, 1
          %s120 = smul.addr %s119, 8
          %s121 = scalar_lea.vmem %s1, %s120
        $region24: #{tpu_custom_call.1} parent=15 // pred_fallthru
          _
      $region16: #{tpu_custom_call.1} parent=5 // pred_fallthru
        _
      %p122 = scmp.le.s32.totalorder 1, %s11
      %p123 = scmp.lt.s32.totalorder %s11, 3
      %p124 = pnand %p122, %p123
      %p125 = pneg %p124
      // Predicated region
      $region25: #{tpu_custom_call.1} parent=5 // pred_check
        _
      $region26: #{tpu_custom_call.1} parent=5 // pred_check_branch
        %127 = sbr.rel (%p124) target = $region28
      $region27: #{tpu_custom_call.1} parent=5 // pred_region
        %s128 = ssub.s32 %s11, 1
        %p129 = scmp.lt.s32.totalorder %s16, 1
        %s130 = scalar_select %p129, %s16, 1
        %s131 = smul.addr %s130, 8
        %s132 = scalar_lea.vmem %s0, %s131
        %p133 = pneg %p37
        %p134 = pneg %p34
        %p135 = scmp.lt.s32.totalorder %s16, 1
        %s136 = scalar_select %p135, %s16, 1
        %s137 = smul.addr %s136, 8
        %s138 = scalar_lea.vmem %s1, %s137
        %p139 = pneg %p63
        %p140 = pneg %p60
        %p141 = pneg %p89
        %p142 = pneg %p86
        %s143 = sand.u32 %s76, 1
        %s144 = scalar_lea.sflag [#allocation3], %s143
        %s145 = sand.u32 %s76, 1
        %s146 = smul.addr %s145, 8
        %s147 = scalar_lea.vmem [#allocation2], %s146
        %p148 = scmp.lt.s32.totalorder %s16, 1
        %s149 = scalar_select %p148, %s16, 1
        %s150 = smul.addr %s149, 8
        %s151 = scalar_lea.vmem %s0, %s150
        %p152 = scmp.lt.s32.totalorder %s16, 1
        %s153 = scalar_select %p152, %s16, 1
        %s154 = smul.addr %s153, 8
        %s155 = scalar_lea.vmem %s1, %s154
        %v156 = vld [vmem:[%s151] sm:$0xff]
        %157 = vmax.xlane.f32.xlu0 %v156
        %v158 = vpop.xlane.xlu0 %157
        %v159 = vsub.f32 %v156, %v158
        %v160 = vmul.f32 %v159, 1.442695
        %v161 = vpow.pop %v160
        %162 = vadd.xlane.f32.xlu0 %v161
        %v163 = vpop.xlane.xlu0 %162
        %v164 = vlog2.pop %v163
        %v165 = vmul.f32 %v164, 0.6931472
        %v166 = vadd.f32 %v165, %v158
        %v167 = vld [vmem:[%s155] sm:$0xff]
        %v168 = vlaneseq
        %v169 = vand.u32 %v168, 127
        %170 = vset.pattern.permute.xlu0 0
        %171 = vperm.xlu0 %170, %v167
        %v172 = vpop.permute.xlu0 %171
        %vm173 = vcmp.eq.s32.totalorder %v169, %v172
        %v174 = vsel %vm173, 0.8, 0.0015748031
        %v175 = vmul.f32 %v174, %v156
        %176 = vadd.xlane.f32.xlu0 %v175
        %v177 = vpop.xlane.xlu0 %176
        %v178 = vsub.f32 %v166, %v177
        %v179 = vlaneseq
        %v180 = vshrl.u32 %v179, 7
        %s181 = smul.u32 %s16, 8
        %v182 = vstv %s181
        %v183 = vadd.s32 %v182, %v180
        %vm184 = vcmp.lt.s32.totalorder %v183, 16
        %v185 = vsel %vm184, %v178, 0.0
        %v186 = vrot.slane %v185, 4
        %v187 = vadd.f32 %v185, %v186
        %v188 = vrot.slane %v187, 2
        %v189 = vadd.f32 %v187, %v188
        %v190 = vrot.slane %v189, 1
        %v191 = vadd.f32 %v189, %v190
        %192 = vst [vmem:[%s147] sm:$0xff] %v191
        %s193 = sand.u32 %s76, 1
        %s194 = scalar_lea.sflag [#allocation3], %s193
        %s195 = sand.u32 %s76, 1
        %s196 = smul.addr %s195, 8
        %s197 = scalar_lea.vmem [#allocation2], %s196
        // Predicated region
        $region29: #{tpu_custom_call.1} parent=27 // pred_check
          %p198 = pneg %p86
        $region30: #{tpu_custom_call.1} parent=27 // pred_check_branch
          %200 = sbr.rel (%p198) target = $region32
        $region31: #{tpu_custom_call.1} parent=27 // pred_region
          %202 = vsyncadd %s194, 0
          %s203 = smul.addr %s16, 8
          %s204 = scalar_lea.hbm %s2, %s203
          %s206 = sshll.u32 %s197, 4
          %s207 = int_to_ptr.vmem [resolvable:$true] %s206
          %s208 = sshll.u32 %s204, 4
          %s209 = int_to_ptr.hbm [resolvable:$true] %s208
          %211 = dma.vmem_to_hbm [thread:$0]  %s207, 128, %s209, %s194
        $region32: #{tpu_custom_call.1} parent=27 // pred_fallthru
          _
      $region28: #{tpu_custom_call.1} parent=5 // pred_fallthru
        _
      %p212 = scmp.le.s32.totalorder 2, %s11
      // Predicated region
      $region33: #{tpu_custom_call.1} parent=5 // pred_check
        %p213 = pneg %p212
      $region34: #{tpu_custom_call.1} parent=5 // pred_check_branch
        %215 = sbr.rel (%p213) target = $region36
      $region35: #{tpu_custom_call.1} parent=5 // pred_region
        %s216 = ssub.s32 %s11, 2
        // Predicated region
        $region37: #{tpu_custom_call.1} parent=35 // pred_check
          %p217 = pneg %p92
        $region38: #{tpu_custom_call.1} parent=35 // pred_check_branch
          %219 = sbr.rel (%p217) target = $region40
        $region39: #{tpu_custom_call.1} parent=35 // pred_region
          %s220 = sand.u32 %s77, 1
          %s221 = scalar_lea.sflag [#allocation3], %s220
          %s222 = sand.u32 %s77, 1
          %s223 = smul.addr %s222, 8
          %s224 = scalar_lea.vmem [#allocation2], %s223
          %226 = dma.done %s221, 128
        $region40: #{tpu_custom_call.1} parent=35 // pred_fallthru
          _
      $region36: #{tpu_custom_call.1} parent=5 // pred_fallthru
        _
    $region6: #{tpu_custom_call.1} parent=1 // loop_footer
      %s15 = sadd.s32 1, %s11
    $region7: #{tpu_custom_call.1} parent=1 // loop_footer_branch
      %10 = sbr.rel target = $region3
    $region8: #{tpu_custom_call.1} parent=1 // loop_exit
      _
    %227 = vsyncpa [#allocation3], 1
    %s228 = scalar_lea.sflag [#allocation3], 1
    %229 = vsyncpa %s228, 1

</llo_original>
